<compile_context>
chip_gen: v7x
topology: tpu7x:2x2x1
jax: 0.10.0
libtpu: 0.0.40
codegen_flags: <defaults>
</compile_context>

<pallas_src>
import functools

import jax
import jax.numpy as jnp
from jax.experimental import pallas as pl
from jax.experimental.pallas import tpu as pltpu

LANE = 128
SUBLANE = 8
VREG_EDGES = SUBLANE * LANE          # 1024 edges per int32 vreg
# 256K edges/tile -> (2048, 128) i32 blocks: (1 MiB in + 1 MiB out), double
# buffered ~= 4 MiB, comfortably inside scoped VMEM on v5e (16 MiB default),
# v6e (32 MiB) and v7x (32 MiB scoped / 64 MiB physical).
MAX_TILE_EDGES = 256 * 1024


def _ceil_to(x: int, m: int) -> int:
    return ((x + m - 1) // m) * m


def _drop_edge_mask_kernel(bits_ref, mask_ref, *, thresh24, num_edges):
    """Mask-only DropEdge kernel.

    bits_ref : (tile_rows, 128) int32, uniform 24-bit random integers.
    mask_ref : (tile_rows, 128) int32, 1 = keep edge, 0 = dropped / padding.
    Edge e lives at flat position e = row * 128 + col of the padded edge axis.
    """
    tile_rows = bits_ref.shape[0]
    drop = bits_ref[...] < jnp.int32(thresh24)            # Bernoulli(p)==1 -> drop
    row = jax.lax.broadcasted_iota(jnp.int32, (tile_rows, LANE), 0)
    col = jax.lax.broadcasted_iota(jnp.int32, (tile_rows, LANE), 1)
    edge_id = (pl.program_id(0) * tile_rows + row) * LANE + col
    keep = jnp.logical_and(jnp.logical_not(drop), edge_id < num_edges)
    mask_ref[...] = keep.astype(jnp.int32)


def drop_edge(edge_index, edge_weight=None, p=0.5, training=True, key=None):
    """JAX/Pallas port of greatx.functional.drop_edge.

    Returns (edge_index_out, edge_weight_out, num_kept): kept edges are stably
    compacted to the front; the tail is padded with -1 (index) / 0 (weight).
    """
    if p < 0.0 or p > 1.0:
        raise ValueError(
            f"Dropout probability has to be between 0 and 1 (got {p})")

    # TODO(synk): PyTorch uses int64 edge indices; int32 is used here (node
    # ids >= 2**31 would wrap).
    ei = jnp.asarray(edge_index, jnp.int32)
    num_edges = ei.shape[1]
    ew = None if edge_weight is None else jnp.asarray(edge_weight, jnp.float32)

    if (not training) or p == 0.0 or num_edges == 0:
        return ei, ew, jnp.int32(num_edges)

    if key is None:
        key = jax.random.PRNGKey(0)

    tile_edges = min(MAX_TILE_EDGES, _ceil_to(num_edges, VREG_EDGES))
    e_pad = _ceil_to(num_edges, tile_edges)
    r_pad = e_pad // LANE
    tile_rows = tile_edges // LANE
    num_tiles = e_pad // tile_edges

    # Uniform 24-bit integers drawn in the wrapper (pltpu.prng_* is TPU-only
    # and has no interpret/CPU lowering); the Bernoulli decision is in-kernel.
    bits24 = (jax.random.bits(key, (r_pad, LANE), dtype=jnp.uint32) >> 8
              ).astype(jnp.int32)
    thresh24 = int(round(float(p) * (1 << 24)))

    kernel = functools.partial(_drop_edge_mask_kernel,
                               thresh24=thresh24, num_edges=num_edges)
    mask = pl.pallas_call(
        kernel,
        out_shape=jax.ShapeDtypeStruct((r_pad, LANE), jnp.int32),
        grid=(num_tiles,),
        in_specs=[pl.BlockSpec((tile_rows, LANE), lambda i: (i, 0))],
        out_specs=pl.BlockSpec((tile_rows, LANE), lambda i: (i, 0)),
        compiler_params=pltpu.CompilerParams(
            dimension_semantics=("parallel",)),
    )(bits24)

    keep = mask.reshape(-1)[:num_edges]                   # int32 {0, 1}
    csum = jnp.cumsum(keep)
    num_kept = csum[-1].astype(jnp.int32)

    # Single-pass compaction: kept edge j goes to column csum[j]-1; dropped
    # edges scatter out of bounds and are discarded (mode="drop").
    # TODO(synk): a truly dynamically-shaped edge_index[:, ~mask] has no
    # XLA/Pallas equivalent; the tail is padded with -1 / 0 instead.
    dest = jnp.where(keep > 0, csum - 1, num_edges)
    ei_out = jnp.full((2, num_edges), -1, jnp.int32).at[:, dest].set(
        ei, mode="drop")
    ew_out = None
    if ew is not None:
        ew_out = jnp.zeros((num_edges,), jnp.float32).at[dest].set(
            ew, mode="drop")
    return ei_out, ew_out, num_kept


class DropEdge:
    """JAX/Pallas port of greatx.nn.layers.DropEdge."""

    def __init__(self, p: float = 0.5):
        if p < 0.0 or p > 1.0:
            raise ValueError(
                f"Dropout probability has to be between 0 and 1 (got {p})")
        self.p = p
        self.training = True

    def __call__(self, edge_index, edge_weight=None, key=None):
        return drop_edge(edge_index, edge_weight, self.p,
                         training=self.training, key=key)


if __name__ == "__main__":
    key = jax.random.PRNGKey(0)
    k_idx, k_w, k_drop = jax.random.split(key, 3)

    num_nodes, num_edges = 10, 20
    edge_index = jax.random.randint(k_idx, (2, num_edges), 0, num_nodes,
                                    dtype=jnp.int32)
    edge_weight = jax.random.uniform(k_w, (num_edges,), jnp.float32)

    layer = DropEdge(p=0.5)
    ei_out, ew_out, n_kept = layer(edge_index, edge_weight, key=k_drop)
    jax.block_until_ready((ei_out, ew_out, n_kept))

    n = int(n_kept)
    assert 0 <= n <= num_edges
    assert ei_out.shape == (2, num_edges) and ew_out.shape == (num_edges,)
    assert bool(jnp.all(ei_out[:, :n] >= 0))       # kept prefix = real edges
    assert bool(jnp.all(ei_out[:, n:] == -1))      # padded tail
    assert bool(jnp.all(ew_out[n:] == 0.0))

    # p == 0 (or eval mode) leaves the graph untouched.
    ei_id, ew_id, n_id = DropEdge(p=0.0)(edge_index, edge_weight, key=k_drop)
    assert int(n_id) == num_edges
    assert bool(jnp.all(ei_id == edge_index))
    assert bool(jnp.all(ew_id == edge_weight))

    print("KERNEL_OK")
</pallas_src>

<mosaic_0001>
module attributes {stable_mosaic.version = 11 : i64} {
  func.func @_drop_edge_mask_kernel(%arg0: i32, %arg1: memref<8x128xi32, #tpu.memory_space<vmem>>, %arg2: memref<8x128xi32, #tpu.memory_space<vmem>>) attributes {dimension_semantics = [#tpu.dimension_semantics<parallel>], iteration_bounds = array<i64: 1>, scalar_prefetch = 0 : i64, scratch_operands = 0 : i64, tpu.core_type = #tpu.core_type<tc>, window_params = [{transform_indices = @transform_0, window_bounds = array<i64: 8, 128>}, {transform_indices = @transform_1, window_bounds = array<i64: 8, 128>}]} {
    %c0 = arith.constant 0 : index
    %c0_0 = arith.constant 0 : index
    %0 = vector.load %arg1[%c0, %c0_0] : memref<8x128xi32, #tpu.memory_space<vmem>>, vector<8x128xi32>
    %c8388608_i32 = arith.constant 8388608 : i32
    %1 = vector.broadcast %c8388608_i32 : i32 to vector<8x128xi32>
    %2 = arith.cmpi slt, %0, %1 : vector<8x128xi32>
    %3 = tpu.iota {dimensions = array<i32: 0>} : vector<8x128xi32>
    %4 = tpu.iota {dimensions = array<i32: 1>} : vector<8x128xi32>
    %c8_i32 = arith.constant 8 : i32
    %5 = arith.muli %arg0, %c8_i32 : i32
    %6 = vector.broadcast %5 : i32 to vector<8x128xi32>
    %7 = arith.addi %6, %3 : vector<8x128xi32>
    %c128_i32 = arith.constant 128 : i32
    %8 = vector.broadcast %c128_i32 : i32 to vector<8x128xi32>
    %9 = arith.muli %7, %8 : vector<8x128xi32>
    %10 = arith.addi %9, %4 : vector<8x128xi32>
    %cst = arith.constant dense<true> : vector<8x128xi1>
    %11 = arith.xori %2, %cst : vector<8x128xi1>
    %c20_i32 = arith.constant 20 : i32
    %12 = vector.broadcast %c20_i32 : i32 to vector<8x128xi32>
    %13 = arith.cmpi slt, %10, %12 : vector<8x128xi32>
    %14 = arith.andi %11, %13 : vector<8x128xi1>
    %15 = arith.extui %14 : vector<8x128xi1> to vector<8x128xi32>
    %c0_1 = arith.constant 0 : index
    %c0_2 = arith.constant 0 : index
    %16 = vector.load %arg2[%c0_1, %c0_2] : memref<8x128xi32, #tpu.memory_space<vmem>>, vector<8x128xi32>
    tpu.vector_store %arg2[%c0_1, %c0_2], %15 {strides = array<i32>} : memref<8x128xi32, #tpu.memory_space<vmem>>, vector<8x128xi32>,
    return
  }
  func.func @transform_0(%arg0: i32) -> (i32, i32) {
    %c0_i32 = arith.constant 0 : i32
    %c0_i32_0 = arith.constant 0 : i32
    return %arg0, %c0_i32 : i32, i32
  }
  func.func @transform_1(%arg0: i32) -> (i32, i32) {
    %c0_i32 = arith.constant 0 : i32
    %c0_i32_0 = arith.constant 0 : i32
    return %arg0, %c0_i32 : i32, i32
  }
}

</mosaic_0001>

<llo_original>
// kernel: tpu_custom_call.1
$region0: #{tpu_custom_call.1}
  #allocation0 [shape = 'u32[]', space=smem, size = 0x4, offset = 0x4, fixed_abs, tag = 'smem constant byte address 0x4 - core index']
  #allocation1 [shape = 'u32[144,128]{1,0:T(1,128)}', space=vmem, size = 0x12000, scoped, tag = 'internal scratch']
  %s0 = inlined_call_operand.hbm [shape: s32[8,128], index: 0, kind: input, shape index: {}]
  %s1 = inlined_call_operand.hbm [shape: s32[8,128], index: 1, kind: output, shape index: {}]
  %s2 = sld [smem:[#allocation0]]
  $region18: #{tpu_custom_call.1} parent=0
    _
  %s4 = ssub.s32 1, %s2
  %s5 = scalar_select 0, %s4, %s2
  $region1: #{tpu_custom_call.1} parent=0
    #allocation2 [shape = 'u8[4096]{0}', space=vmem, size = 0x1000, scoped, tag = 'input window, operand 0, single buffered']
    #allocation3 [shape = 's32[1]{0}', space=sflag, size = 0x4, scoped, tag = 'scoped memory for tpu_custom_call.1']
    #allocation4 [shape = 's32[1]{0}', space=sflag, size = 0x4, scoped, tag = 'scoped memory for tpu_custom_call.1']
    #allocation5 [shape = 'u8[4096]{0}', space=vmem, size = 0x1000, scoped, tag = 'output window, operand 0, single buffered']
    %6 = vsyncpa [#allocation3], 0
    %7 = vsyncpa [#allocation4], 0
    // Predicated region
    $region2: #{tpu_custom_call.1} parent=1 // pred_check
      _
    $region3: #{tpu_custom_call.1} parent=1 // pred_check_branch
      %9 = sbr.rel (0) target = $region5
    $region4: #{tpu_custom_call.1} parent=1 // pred_region
      %s11 = ssub.s32 128, 128
      %12 = vsyncadd [#allocation3], %s11
      %s14 = sshll.u32 [#allocation2], 4
      %s15 = int_to_ptr.vmem [resolvable:$true] %s14
      %17 = dma.hbm_to_vmem [thread:$0]  %s0, 128, %s15, [#allocation3]
    $region5: #{tpu_custom_call.1} parent=1 // pred_fallthru
      _
    // Predicated region
    $region6: #{tpu_custom_call.1} parent=1 // pred_check
      _
    $region7: #{tpu_custom_call.1} parent=1 // pred_check_branch
      %19 = sbr.rel (0) target = $region9
    $region8: #{tpu_custom_call.1} parent=1 // pred_region
      %20 = dma.done [#allocation3], 128
    $region9: #{tpu_custom_call.1} parent=1 // pred_fallthru
      _
    %v21 = vld [vmem:[#allocation2] sm:$0xff]
    %vm22 = vcmp.lt.s32.totalorder %v21, 8388608
    %v23 = vlaneseq
    %v24 = vshrl.u32 %v23, 7
    %v25 = vlaneseq
    %v26 = vand.u32 %v25, 127
    %s27 = smul.u32 0, 8
    %v28 = vstv %s27
    %v29 = vadd.s32 %v28, %v24
    %v30 = vmul.u32 %v29, 128
    %v31 = vadd.s32 %v30, %v26
    %vm32 = vmxor %vm22, 1
    %vm33 = vcmp.lt.s32.totalorder %v31, 20
    %vm34 = vmand %vm32, %vm33
    %v35 = vsel %vm34, 1, 0
    %36 = vst [vmem:[#allocation5] sm:$0xff] %v35
    // Predicated region
    $region10: #{tpu_custom_call.1} parent=1 // pred_check
      _
    $region11: #{tpu_custom_call.1} parent=1 // pred_check_branch
      %38 = sbr.rel (0) target = $region13
    $region12: #{tpu_custom_call.1} parent=1 // pred_region
      %s40 = ssub.s32 128, 128
      %41 = vsyncadd [#allocation4], %s40
      %s43 = sshll.u32 [#allocation5], 4
      %s44 = int_to_ptr.vmem [resolvable:$true] %s43
      %46 = dma.vmem_to_hbm [thread:$0]  %s44, 128, %s1, [#allocation4]
    $region13: #{tpu_custom_call.1} parent=1 // pred_fallthru
      _
    // Predicated region
    $region14: #{tpu_custom_call.1} parent=1 // pred_check
      _
    $region15: #{tpu_custom_call.1} parent=1 // pred_check_branch
      %48 = sbr.rel (0) target = $region17
    $region16: #{tpu_custom_call.1} parent=1 // pred_region
      %49 = dma.done [#allocation4], 128
    $region17: #{tpu_custom_call.1} parent=1 // pred_fallthru
      _
    %50 = vsyncpa [#allocation3], 1
    %51 = vsyncpa [#allocation4], 1

</llo_original>
